<compile_context>
chip_gen: v5e
topology: v5e:2x2
jax: 0.10.0
libtpu: 0.0.40
codegen_flags: <defaults>
</compile_context>

<pallas_src>
import math
import functools

import jax
import jax.numpy as jnp
import numpy as np
from jax.experimental import pallas as pl
from jax.experimental.pallas import tpu as pltpu

_VMEM_LIMIT = 48 * 1024 * 1024   # scoped-VMEM budget; < v7x's 64 MiB physical


# ---------------------------------------------------------------------------
# Tile chooser: largest multiple of `align` <= preferred that divides `dim`,
# else fall back to the full dim (always legal for a BlockSpec).
# ---------------------------------------------------------------------------
def _tile(dim, preferred, align):
    t = min(preferred, dim)
    t -= t % align
    while t >= align:
        if dim % t == 0:
            return t
        t -= align
    return dim


# ---------------------------------------------------------------------------
# Kernel 1: tiled dense linear layer  y = x @ W + b
# ---------------------------------------------------------------------------
def _linear_kernel(x_ref, w_ref, b_ref, o_ref, acc_ref, *, matmul_dtype):
    k = pl.program_id(2)

    @pl.when(k == 0)
    def _():
        acc_ref[...] = jnp.zeros_like(acc_ref)

    x = x_ref[...]                       # (tm, tk)
    w = w_ref[...]                       # (tk, tn)
    if matmul_dtype is not None:         # bf16 MXU inputs, f32 accumulation
        x = x.astype(matmul_dtype)
        w = w.astype(matmul_dtype)
    acc_ref[...] += jnp.dot(x, w, preferred_element_type=jnp.float32)

    @pl.when(k == pl.num_programs(2) - 1)
    def _():
        o_ref[...] = (acc_ref[...] + b_ref[...].astype(jnp.float32)).astype(o_ref.dtype)


def linear(x, w, b, *, matmul_dtype=jnp.bfloat16,
           tm_pref=512, tn_pref=1024, tk_pref=512):
    """x: (N, K), w: (K, D_out), b: (D_out,) -> (N, D_out)."""
    N, K = x.shape
    K2, D_out = w.shape
    assert K == K2
    tm = _tile(N, tm_pref, 8)
    tn = _tile(D_out, tn_pref, 128)
    tk = _tile(K, tk_pref, 128)
    grid = (N // tm, D_out // tn, K // tk)

    kernel = functools.partial(_linear_kernel, matmul_dtype=matmul_dtype)
    return pl.pallas_call(
        kernel,
        out_shape=jax.ShapeDtypeStruct((N, D_out), x.dtype),
        grid=grid,
        in_specs=[
            pl.BlockSpec((tm, tk), lambda i, j, k: (i, k)),
            pl.BlockSpec((tk, tn), lambda i, j, k: (k, j)),
            pl.BlockSpec((1, tn), lambda i, j, k: (0, j)),
        ],
        out_specs=pl.BlockSpec((tm, tn), lambda i, j, k: (i, j)),
        scratch_shapes=[pltpu.VMEM((tm, tn), jnp.float32)],
        compiler_params=pltpu.CompilerParams(
            dimension_semantics=("parallel", "parallel", "arbitrary"),
            vmem_limit_bytes=_VMEM_LIMIT),
    )(x, w, b.reshape(1, D_out))


# ---------------------------------------------------------------------------
# Kernel 2: scaled dot-product attention, query-tiled grid (B, Sq // tq)
# ---------------------------------------------------------------------------
def _attn_body(q_ref, k_ref, v_ref, m_ref, o_ref, acc_ref, *, h, d_k, scale,
               matmul_dtype):
    """q: (tq, d_model), k/v: (Skv, d_model), m: (tq, Skv) int8 or None."""
    q_all = q_ref[...] * jnp.float32(scale)     # fold 1/sqrt(d_k) into q once
    k_all = k_ref[...]
    v_all = v_ref[...]
    if matmul_dtype is not None:                # one cast pass, shared by heads
        q_all = q_all.astype(matmul_dtype)
        k_all = k_all.astype(matmul_dtype)
        v_all = v_all.astype(matmul_dtype)
    if m_ref is not None:
        mask_zero = m_ref[...] == 0             # computed once, reused per head
        neg = jnp.float32(-1e9)

    for head in range(h):                       # static unroll
        sl = slice(head * d_k, (head + 1) * d_k)
        q, k, v = q_all[:, sl], k_all[:, sl], v_all[:, sl]
        # contract trailing dims of q and k directly (no explicit k.T).
        s = jax.lax.dot_general(
            q, k, dimension_numbers=(((1,), (1,)), ((), ())),
            preferred_element_type=jnp.float32)          # (tq, Skv) f32
        if m_ref is not None:
            s = jnp.where(mask_zero, neg, s)             # masked_fill(mask==0, -1e9)
        # numerically-stable softmax (max/exp/sum in f32, EUP reciprocal)
        s = s - jnp.max(s, axis=-1, keepdims=True)
        p = jnp.exp(s)
        p = p * pl.reciprocal(jnp.sum(p, axis=-1, keepdims=True), approx=True)
        # per-head write into scratch slice: bounds liveness, no concatenate.
        acc_ref[:, sl] = jnp.dot(p.astype(v.dtype), v,
                                 preferred_element_type=jnp.float32)

    o_ref[...] = acc_ref[...].astype(o_ref.dtype)        # one lane-dense store


def _attn_kernel_masked(q_ref, k_ref, v_ref, m_ref, o_ref, acc_ref, **kw):
    _attn_body(q_ref, k_ref, v_ref, m_ref, o_ref, acc_ref, **kw)


def _attn_kernel_nomask(q_ref, k_ref, v_ref, o_ref, acc_ref, **kw):
    _attn_body(q_ref, k_ref, v_ref, None, o_ref, acc_ref, **kw)


def attention(q, k, v, mask=None, *, h, matmul_dtype=jnp.bfloat16, tq_pref=256):
    """q: (B, Sq, d_model); k/v: (B, Skv, d_model); mask broadcastable to
    (B, Sq, Skv) of {0,1} or None -> (B, Sq, d_model)."""
    B, Sq, d_model = q.shape
    Skv = k.shape[1]
    d_k = d_model // h
    tq = _tile(Sq, tq_pref, 8)
    grid = (B, Sq // tq)

    in_specs = [
        pl.BlockSpec((None, tq, d_model), lambda b, i: (b, i, 0)),
        pl.BlockSpec((None, Skv, d_model), lambda b, i: (b, 0, 0)),
        pl.BlockSpec((None, Skv, d_model), lambda b, i: (b, 0, 0)),
    ]
    args = [q, k, v]
    common = dict(h=h, d_k=d_k, scale=1.0 / math.sqrt(d_k),
                  matmul_dtype=matmul_dtype)

    if mask is not None:
        mask_i8 = (mask != 0).astype(jnp.int8)           # 4x smaller DMA than f32
        if mask_i8.ndim == 2:
            mask_i8 = mask_i8[None]
        if mask_i8.shape[1] == 1:                        # broadcast over query dim
            mask_i8 = jnp.broadcast_to(mask_i8, (mask_i8.shape[0], Sq, Skv))
        if mask_i8.shape[0] == 1:                        # shared across batch
            in_specs.append(pl.BlockSpec((None, tq, Skv), lambda b, i: (0, i, 0)))
        else:
            in_specs.append(pl.BlockSpec((None, tq, Skv), lambda b, i: (b, i, 0)))
        args.append(mask_i8)
        kernel = functools.partial(_attn_kernel_masked, **common)
    else:
        kernel = functools.partial(_attn_kernel_nomask, **common)

    return pl.pallas_call(
        kernel,
        out_shape=jax.ShapeDtypeStruct((B, Sq, d_model), q.dtype),
        grid=grid,
        in_specs=in_specs,
        out_specs=pl.BlockSpec((None, tq, d_model), lambda b, i: (b, i, 0)),
        scratch_shapes=[pltpu.VMEM((tq, d_model), jnp.float32)],
        compiler_params=pltpu.CompilerParams(
            dimension_semantics=("parallel", "parallel"),
            vmem_limit_bytes=_VMEM_LIMIT),
    )(*args)


# ---------------------------------------------------------------------------
# MultiHeadedAttention forward (Pallas kernels + minimal JAX glue)
# ---------------------------------------------------------------------------
def multi_headed_attention(params, query, key, value, mask=None, *, h,
                           matmul_dtype=jnp.bfloat16):
    """query: (B, Sq, d_model); key/value: (B, Skv, d_model);
    mask: broadcastable to (B, Sq, Skv) of {0,1} or None."""
    B, Sq, d_model = query.shape
    Skv = key.shape[1]
    assert d_model % h == 0

    q = linear(query.reshape(B * Sq, d_model), params["wq"], params["bq"],
               matmul_dtype=matmul_dtype).reshape(B, Sq, d_model)
    k = linear(key.reshape(B * Skv, d_model), params["wk"], params["bk"],
               matmul_dtype=matmul_dtype).reshape(B, Skv, d_model)
    v = linear(value.reshape(B * Skv, d_model), params["wv"], params["bv"],
               matmul_dtype=matmul_dtype).reshape(B, Skv, d_model)

    # TODO(synk): training-mode dropout (p=0.1) on attention probabilities.
    x = attention(q, k, v, mask, h=h, matmul_dtype=matmul_dtype)

    out = linear(x.reshape(B * Sq, d_model), params["wo"], params["bo"],
                 matmul_dtype=matmul_dtype)
    return out.reshape(B, Sq, d_model)


# ---------------------------------------------------------------------------
# Pure-JAX reference (mirrors the PyTorch code, dropout = identity, f32)
# ---------------------------------------------------------------------------
def reference(params, query, key, value, mask, *, h):
    B, Sq, d_model = query.shape
    Skv = key.shape[1]
    d_k = d_model // h

    def lin(x, w, b):
        return x @ w + b

    def proj(x, w, b, S):
        return lin(x, w, b).reshape(B, S, h, d_k).transpose(0, 2, 1, 3)

    q = proj(query, params["wq"], params["bq"], Sq)
    k = proj(key, params["wk"], params["bk"], Skv)
    v = proj(value, params["wv"], params["bv"], Skv)
    scores = jnp.einsum("bhqd,bhkd->bhqk", q, k) / math.sqrt(d_k)
    if mask is not None:
        m = mask[:, None, :, :]                          # unsqueeze(1)
        scores = jnp.where(m == 0, -1e9, scores)
    p = jax.nn.softmax(scores, axis=-1)
    x = jnp.einsum("bhqk,bhkd->bhqd", p, v)
    x = x.transpose(0, 2, 1, 3).reshape(B, Sq, d_model)
    return lin(x, params["wo"], params["bo"])


# ---------------------------------------------------------------------------
def init_params(key, d_model):
    bound = 1.0 / math.sqrt(d_model)
    names = ["wq", "bq", "wk", "bk", "wv", "bv", "wo", "bo"]
    keys = jax.random.split(key, len(names))
    params = {}
    for n, kk in zip(names, keys):
        shape = (d_model, d_model) if n.startswith("w") else (d_model,)
        params[n] = jax.random.uniform(
            kk, shape, dtype=jnp.float32, minval=-bound, maxval=bound)
    return params


if __name__ == "__main__":
    B, S, d_model, h = 2, 8, 32, 4

    root = jax.random.PRNGKey(0)
    kp, kq, kk, kv = jax.random.split(root, 4)

    params = init_params(kp, d_model)
    x_self = jax.random.normal(kq, (B, S, d_model), dtype=jnp.float32)
    key_in = jax.random.normal(kk, (B, S, d_model), dtype=jnp.float32)
    value_in = jax.random.normal(kv, (B, S, d_model), dtype=jnp.float32)

    # causal mask (B, S, S); PyTorch side would unsqueeze(1) before broadcast
    mask = jnp.tril(jnp.ones((S, S), dtype=jnp.float32))[None].repeat(B, axis=0)

    # bf16 MXU inputs with f32 accumulation -> compare vs f32 reference at
    # a correspondingly relaxed tolerance (deliberate precision change).
    TOL = 3e-2

    # 1) self-attention with causal mask (exercises the masked kernel path)
    out_sa = multi_headed_attention(params, x_self, x_self, x_self, mask, h=h)
    out_sa = jax.block_until_ready(out_sa)
    ref_sa = reference(params, x_self, x_self, x_self, mask, h=h)
    np.testing.assert_allclose(np.asarray(out_sa), np.asarray(ref_sa),
                               rtol=TOL, atol=TOL)

    # 2) cross-attention, no mask (exercises the maskless kernel path)
    out_ca = multi_headed_attention(params, x_self, key_in, value_in, None, h=h)
    out_ca = jax.block_until_ready(out_ca)
    ref_ca = reference(params, x_self, key_in, value_in, None, h=h)
    np.testing.assert_allclose(np.asarray(out_ca), np.asarray(ref_ca),
                               rtol=TOL, atol=TOL)

    print("KERNEL_OK")
</pallas_src>

<mosaic_0001>
module attributes {stable_mosaic.version = 11 : i64} {
  func.func @_linear_kernel(%arg0: i32, %arg1: i32, %arg2: i32, %arg3: memref<16x32xf32, #tpu.memory_space<vmem>>, %arg4: memref<32x32xf32, #tpu.memory_space<vmem>>, %arg5: memref<1x32xf32, #tpu.memory_space<vmem>>, %arg6: memref<16x32xf32, #tpu.memory_space<vmem>>, %arg7: memref<16x32xf32, #tpu.memory_space<vmem>>) attributes {dimension_semantics = [#tpu.dimension_semantics<parallel>, #tpu.dimension_semantics<parallel>, #tpu.dimension_semantics<arbitrary>], iteration_bounds = array<i64: 1, 1, 1>, scalar_prefetch = 0 : i64, scratch_operands = 1 : i64, tpu.core_type = #tpu.core_type<tc>, window_params = [{transform_indices = @transform_0, window_bounds = array<i64: 16, 32>}, {transform_indices = @transform_1, window_bounds = array<i64: 32, 32>}, {transform_indices = @transform_2, window_bounds = array<i64: 1, 32>}, {transform_indices = @transform_3, window_bounds = array<i64: 16, 32>}]} {
    %c0_i32 = arith.constant 0 : i32
    %0 = arith.cmpi eq, %arg2, %c0_i32 : i32
    %1 = arith.extui %0 : i1 to i32
    %c0_i32_0 = arith.constant 0 : i32
    %2 = arith.cmpi ne, %1, %c0_i32_0 : i32
    scf.if %2 {
      %cst_10 = arith.constant 0.000000e+00 : f32
      %14 = vector.broadcast %cst_10 : f32 to vector<16x32xf32>
      %c0_11 = arith.constant 0 : index
      %c0_12 = arith.constant 0 : index
      %15 = vector.load %arg7[%c0_11, %c0_12] : memref<16x32xf32, #tpu.memory_space<vmem>>, vector<16x32xf32>
      tpu.vector_store %arg7[%c0_11, %c0_12], %14 {strides = array<i32>} : memref<16x32xf32, #tpu.memory_space<vmem>>, vector<16x32xf32>,
    } else {
    }
    %c0 = arith.constant 0 : index
    %c0_1 = arith.constant 0 : index
    %3 = vector.load %arg3[%c0, %c0_1] : memref<16x32xf32, #tpu.memory_space<vmem>>, vector<16x32xf32>
    %c0_2 = arith.constant 0 : index
    %c0_3 = arith.constant 0 : index
    %4 = vector.load %arg4[%c0_2, %c0_3] : memref<32x32xf32, #tpu.memory_space<vmem>>, vector<32x32xf32>
    %5 = arith.truncf %3 : vector<16x32xf32> to vector<16x32xbf16>
    %6 = arith.truncf %4 : vector<32x32xf32> to vector<32x32xbf16>
    %c0_4 = arith.constant 0 : index
    %c0_5 = arith.constant 0 : index
    %7 = vector.load %arg7[%c0_4, %c0_5] : memref<16x32xf32, #tpu.memory_space<vmem>>, vector<16x32xf32>
    %cst = arith.constant dense<0.000000e+00> : vector<16x32xf32>
    %8 = tpu.matmul %5, %6, %cst {dimension_numbers = #tpu.dot_dimension_numbers<[1], [0], [0], [1], [0, 0, 1, 1], [], []>} : vector<16x32xbf16>, vector<32x32xbf16>, vector<16x32xf32> -> vector<16x32xf32>
    %9 = arith.addf %7, %8 : vector<16x32xf32>
    %c0_6 = arith.constant 0 : index
    %c0_7 = arith.constant 0 : index
    %10 = vector.load %arg7[%c0_6, %c0_7] : memref<16x32xf32, #tpu.memory_space<vmem>>, vector<16x32xf32>
    tpu.vector_store %arg7[%c0_6, %c0_7], %9 {strides = array<i32>} : memref<16x32xf32, #tpu.memory_space<vmem>>, vector<16x32xf32>,
    %c0_i32_8 = arith.constant 0 : i32
    %11 = arith.cmpi eq, %arg2, %c0_i32_8 : i32
    %12 = arith.extui %11 : i1 to i32
    %c0_i32_9 = arith.constant 0 : i32
    %13 = arith.cmpi ne, %12, %c0_i32_9 : i32
    scf.if %13 {
      %c0_10 = arith.constant 0 : index
      %c0_11 = arith.constant 0 : index
      %14 = vector.load %arg7[%c0_10, %c0_11] : memref<16x32xf32, #tpu.memory_space<vmem>>, vector<16x32xf32>
      %c0_12 = arith.constant 0 : index
      %c0_13 = arith.constant 0 : index
      %15 = vector.load %arg5[%c0_12, %c0_13] : memref<1x32xf32, #tpu.memory_space<vmem>>, vector<1x32xf32>
      %16 = vector.broadcast %15 : vector<1x32xf32> to vector<16x32xf32>
      %17 = arith.addf %14, %16 : vector<16x32xf32>
      %c0_14 = arith.constant 0 : index
      %c0_15 = arith.constant 0 : index
      %18 = vector.load %arg6[%c0_14, %c0_15] : memref<16x32xf32, #tpu.memory_space<vmem>>, vector<16x32xf32>
      tpu.vector_store %arg6[%c0_14, %c0_15], %17 {strides = array<i32>} : memref<16x32xf32, #tpu.memory_space<vmem>>, vector<16x32xf32>,
    } else {
    }
    return
  }
  func.func @transform_0(%arg0: i32, %arg1: i32, %arg2: i32) -> (i32, i32) {
    %c0_i32 = arith.constant 0 : i32
    return %arg0, %arg2 : i32, i32
  }
  func.func @transform_1(%arg0: i32, %arg1: i32, %arg2: i32) -> (i32, i32) {
    %c0_i32 = arith.constant 0 : i32
    return %arg2, %arg1 : i32, i32
  }
  func.func @transform_2(%arg0: i32, %arg1: i32, %arg2: i32) -> (i32, i32) {
    %c0_i32 = arith.constant 0 : i32
    %c0_i32_0 = arith.constant 0 : i32
    return %c0_i32, %arg1 : i32, i32
  }
  func.func @transform_3(%arg0: i32, %arg1: i32, %arg2: i32) -> (i32, i32) {
    %c0_i32 = arith.constant 0 : i32
    return %arg0, %arg1 : i32, i32
  }
}

</mosaic_0001>

<llo_original>
// kernel: tpu_custom_call.1
$region0: #{tpu_custom_call.1}
  #allocation0 [shape = 'u32[]', space=smem, size = 0x4, offset = 0x4, fixed_abs, tag = 'smem constant byte address 0x4 - core index']
  #allocation1 [shape = 'u32[72,128]{1,0:T(1,128)}', space=vmem, size = 0x9000, scoped, tag = 'internal scratch']
  #allocation2 [shape = 'f32[16,32]{1,0:T(8,128)}', space=vmem, size = 0x2000, scoped, tag = 'scratch operand']
  %s0 = inlined_call_operand.hbm [shape: f32[16,32], index: 0, kind: input, shape index: {}]
  %s1 = inlined_call_operand.hbm [shape: f32[32,32], index: 1, kind: input, shape index: {}]
  %s2 = inlined_call_operand.vmem [shape: f32[1,32], index: 2, kind: input, shape index: {}]
  %s3 = inlined_call_operand.hbm [shape: f32[16,32], index: 3, kind: output, shape index: {}]
  %s4 = sld [smem:[#allocation0]]
  $region38: #{tpu_custom_call.1} parent=0
    _
  %s6 = ssub.s32 1, %s4
  %s7 = scalar_select 0, %s6, %s4
  $region1: #{tpu_custom_call.1} parent=0
    #allocation3 [shape = 'u8[8192]{0}', space=vmem, size = 0x2000, scoped, tag = 'input window, operand 0, single buffered']
    #allocation4 [shape = 's32[1]{0}', space=sflag, size = 0x4, scoped, tag = 'scoped memory for tpu_custom_call.1']
    #allocation5 [shape = 's32[1]{0}', space=sflag, size = 0x4, scoped, tag = 'scoped memory for tpu_custom_call.1']
    #allocation6 [shape = 'u8[16384]{0}', space=vmem, size = 0x4000, scoped, tag = 'input window, operand 1, single buffered']
    #allocation7 [shape = 's32[1]{0}', space=sflag, size = 0x4, scoped, tag = 'scoped memory for tpu_custom_call.1']
    #allocation8 [shape = 'u8[8192]{0}', space=vmem, size = 0x2000, scoped, tag = 'output window, operand 0, single buffered']
    %8 = vsyncpa [#allocation4], 0
    %9 = vsyncpa [#allocation7], 0
    %10 = vsyncpa [#allocation5], 0
    // Predicated region
    $region2: #{tpu_custom_call.1} parent=1 // pred_check
      _
    $region3: #{tpu_custom_call.1} parent=1 // pred_check_branch
      %12 = sbr.rel (0) target = $region5
    $region4: #{tpu_custom_call.1} parent=1 // pred_region
      %14 = vsyncadd [#allocation4], 0
      %s15 = sshll.u32 %s0, 4
      %s16 = int_to_ptr.hbm [resolvable:$true] %s15
      %s17 = sshll.u32 [#allocation3], 4
      %s18 = int_to_ptr.vmem [resolvable:$true] %s17
      %23 = dma.hbm_to_vmem [thread:$0]  %s16, 256, %s18, [#allocation4], 128, 128, 8
    $region5: #{tpu_custom_call.1} parent=1 // pred_fallthru
      _
    // Predicated region
    $region6: #{tpu_custom_call.1} parent=1 // pred_check
      _
    $region7: #{tpu_custom_call.1} parent=1 // pred_check_branch
      %25 = sbr.rel (0) target = $region9
    $region8: #{tpu_custom_call.1} parent=1 // pred_region
      %27 = vsyncadd [#allocation7], 0
      %s28 = sshll.u32 %s1, 4
      %s29 = int_to_ptr.hbm [resolvable:$true] %s28
      %s30 = sshll.u32 [#allocation6], 4
      %s31 = int_to_ptr.vmem [resolvable:$true] %s30
      %36 = dma.hbm_to_vmem [thread:$0]  %s29, 512, %s31, [#allocation7], 128, 128, 8
    $region9: #{tpu_custom_call.1} parent=1 // pred_fallthru
      _
    // Predicated region
    $region10: #{tpu_custom_call.1} parent=1 // pred_check
      _
    $region11: #{tpu_custom_call.1} parent=1 // pred_check_branch
      %38 = sbr.rel (0) target = $region13
    $region12: #{tpu_custom_call.1} parent=1 // pred_region
      _
    $region13: #{tpu_custom_call.1} parent=1 // pred_fallthru
      _
    // Predicated region
    $region14: #{tpu_custom_call.1} parent=1 // pred_check
      _
    $region15: #{tpu_custom_call.1} parent=1 // pred_check_branch
      %40 = sbr.rel (0) target = $region17
    $region16: #{tpu_custom_call.1} parent=1 // pred_region
      %42 = dma.done [#allocation4], 256
    $region17: #{tpu_custom_call.1} parent=1 // pred_fallthru
      _
    // Predicated region
    $region18: #{tpu_custom_call.1} parent=1 // pred_check
      _
    $region19: #{tpu_custom_call.1} parent=1 // pred_check_branch
      %44 = sbr.rel (0) target = $region21
    $region20: #{tpu_custom_call.1} parent=1 // pred_region
      %46 = dma.done [#allocation7], 512
    $region21: #{tpu_custom_call.1} parent=1 // pred_fallthru
      _
    %p48 = scmp.eq.s32.totalorder 0, 0
    // Predicated region
    $region22: #{tpu_custom_call.1} parent=1 // pred_check
      %p49 = pneg %p48
    $region23: #{tpu_custom_call.1} parent=1 // pred_check_branch
      %51 = sbr.rel (%p49) target = $region25
    $region24: #{tpu_custom_call.1} parent=1 // pred_region
      %vm52 = vcmask 261120
      %53 = vst.msk [vmem:[#allocation2] sm:$0xff] %vm52, 0.0
      %54 = vst.msk [vmem:[#allocation2 + $0x8] sm:$0xff] %vm52, 0.0
    $region25: #{tpu_custom_call.1} parent=1 // pred_fallthru
      _
    %v55 = vld [vmem:[#allocation3] sm:$0xff]
    %v56 = vld [vmem:[#allocation3 + $0x8] sm:$0xff]
    %v57 = vld [vmem:[#allocation6] sm:$0xff]
    %v58 = vld [vmem:[#allocation6 + $0x8] sm:$0xff]
    %v59 = vld [vmem:[#allocation6 + $0x10] sm:$0xff]
    %v60 = vld [vmem:[#allocation6 + $0x18] sm:$0xff]
    %v61 = vpack.c.bf16 %v56, %v55
    %v62 = vpack.c.bf16 %v58, %v57
    %v63 = vpack.c.bf16 %v60, %v59
    %v64 = vld [vmem:[#allocation2] sm:$0xff]
    %v65 = vld [vmem:[#allocation2 + $0x8] sm:$0xff]
    %vm66 = vcmask 261120
    %v68 = vsel %vm66, %v61, 0
    %70 = vmatpush.bf16.msra.mxu0 0
    %71 = vmatpush.bf16.msra.mxu0 0
    %72 = vmatpush.bf16.msra.mxu0 0
    %73 = vmatpush.bf16.msra.mxu0 0
    %74 = vmatpush.bf16.msra.mxu0 0
    %75 = vmatpush.bf16.msra.mxu0 0
    %76 = vmatpush.bf16.msra.mxu0 %v63
    %77 = vmatpush.bf16.msra.mxu0 %v62
    %78 = vmatmul.bf16.gmra.mxu0 %v68
    %v79 = vpop.f32.mrf.mxu0
    %v80 = vadd.f32 0.0, %v79
    %v81 = vpop.f32.mrf.mxu0
    %v82 = vadd.f32 0.0, %v81
    %83 = vdwg.mxu0
    %v84 = vadd.f32 %v64, %v80
    %v85 = vadd.f32 %v65, %v82
    %86 = vst.msk [vmem:[#allocation2] sm:$0xff] %vm66, %v84
    %87 = vst.msk [vmem:[#allocation2 + $0x8] sm:$0xff] %vm66, %v85
    // Predicated region
    $region26: #{tpu_custom_call.1} parent=1 // pred_check
      %p88 = pneg %p48
    $region27: #{tpu_custom_call.1} parent=1 // pred_check_branch
      %90 = sbr.rel (%p88) target = $region29
    $region28: #{tpu_custom_call.1} parent=1 // pred_region
      %v91 = vld [vmem:[#allocation2] sm:$0xff]
      %v92 = vld [vmem:[#allocation2 + $0x8] sm:$0xff]
      %v93 = vld [vmem:[%s2] sm:$0x1]
      %v95 = vperm.slane %v93, 0
      %v97 = vadd.f32 %v91, %v95
      %v98 = vadd.f32 %v92, %v95
      %99 = vst.msk [vmem:[#allocation8] sm:$0xff] %vm66, %v97
      %100 = vst.msk [vmem:[#allocation8 + $0x8] sm:$0xff] %vm66, %v98
    $region29: #{tpu_custom_call.1} parent=1 // pred_fallthru
      _
    // Predicated region
    $region30: #{tpu_custom_call.1} parent=1 // pred_check
      _
    $region31: #{tpu_custom_call.1} parent=1 // pred_check_branch
      %102 = sbr.rel (0) target = $region33
    $region32: #{tpu_custom_call.1} parent=1 // pred_region
      %104 = vsyncadd [#allocation5], 0
      %s105 = sshll.u32 [#allocation8], 4
      %s106 = int_to_ptr.vmem [resolvable:$true] %s105
      %s107 = sshll.u32 %s3, 4
      %s108 = int_to_ptr.hbm [resolvable:$true] %s107
      %113 = dma.vmem_to_hbm [thread:$0]  %s106, 256, %s108, [#allocation5], 128, 128, 8
    $region33: #{tpu_custom_call.1} parent=1 // pred_fallthru
      _
    // Predicated region
    $region34: #{tpu_custom_call.1} parent=1 // pred_check
      _
    $region35: #{tpu_custom_call.1} parent=1 // pred_check_branch
      %115 = sbr.rel (0) target = $region37
    $region36: #{tpu_custom_call.1} parent=1 // pred_region
      %117 = dma.done [#allocation5], 256
    $region37: #{tpu_custom_call.1} parent=1 // pred_fallthru
      _
    %118 = vsyncpa [#allocation4], 1
    %119 = vsyncpa [#allocation7], 1
    %120 = vsyncpa [#allocation5], 1

</llo_original>
